<compile_context>
chip_gen: v7x
topology: tpu7x:2x2x1
jax: 0.10.0
libtpu: 0.0.40
codegen_flags: <defaults>
</compile_context>

<pallas_src>
import functools

import jax
import jax.numpy as jnp
from jax.experimental import pallas as pl
from jax.experimental.pallas import tpu as pltpu


def _af_kernel(snr_ref, x_ref, w1x_ref, w1s_ref, b1_ref, w2_ref, b2_ref,
               out_ref, *, inv_hw):
    # snr_ref: [B, 1]        (SMEM, whole array, scalar reads)
    # x_ref / out_ref: [1, C, HWp]   (VMEM, one batch per grid step)
    # w1x: [C, Ch]  w1s: [1, Ch]  b1: [1, Ch]  w2: [Ch, C]  b2: [1, C]  (resident)
    b = pl.program_id(0)

    # --- squeeze: adaptive avg-pool to 1x1.  Padded lanes are zero so the sum
    #     is exact; divide by the true H*W.  Accumulate in float32.
    pooled = jnp.sum(x_ref[...].astype(jnp.float32), axis=-1) * inv_hw      # [1, C]

    # --- excitation MLP: cat([pooled, snr]) @ W1 folded into two terms.
    snr = snr_ref[b, 0].astype(jnp.float32)                                  # scalar
    h = jnp.dot(pooled, w1x_ref[...].astype(jnp.float32),
                preferred_element_type=jnp.float32)                          # [1, Ch]
    h = jnp.maximum(h + snr * w1s_ref[...] + b1_ref[...], 0.0)
    g = jnp.dot(h, w2_ref[...].astype(jnp.float32),
                preferred_element_type=jnp.float32)                          # [1, C]
    g = jax.nn.sigmoid(g + b2_ref[...])

    # --- scale: re-read x from VMEM now that the gate is ready (don't keep a
    #     large tile live across the MLP -> streamed multiply, no spills).
    out_ref[...] = (x_ref[...].astype(jnp.float32)
                    * g[:, :, None]).astype(out_ref.dtype)


def af_layer(x, snr, params):
    """x: [B, C, H, W] (NCHW, f32 or bf16), snr: [B, 1].  Returns x * gate."""
    B, C, H, W = x.shape
    HW = H * W
    HWp = ((HW + 127) // 128) * 128          # lane-dense (multiple-of-128) last dim
    Ch = params["w1x"].shape[1]

    x2 = x.reshape(B, C, HW)
    if HWp != HW:
        # Zero padding keeps the pooled SUM exact; mean divides by true HW.
        x2 = jnp.pad(x2, ((0, 0), (0, 0), (0, HWp - HW)))

    itemsize = jnp.dtype(x.dtype).itemsize
    block_bytes = C * HWp * itemsize
    param_bytes = 4 * (C * Ch + Ch + Ch + Ch * C + C)
    # x block + out block, double-buffered, + resident params + headroom.
    vmem_limit = int(min(64 * 2 ** 20,
                         max(32 * 2 ** 20,
                             4 * block_bytes + 2 * param_bytes + (4 << 20))))

    cost = pl.CostEstimate(
        flops=4 * B * C * Ch + 3 * B * C * HWp,      # two tiny matmuls + pool + scale
        transcendentals=B * C,                       # sigmoid
        bytes_accessed=2 * B * C * HWp * itemsize,   # read x, write out (HBM-bound)
    )

    out = pl.pallas_call(
        functools.partial(_af_kernel, inv_hw=1.0 / float(HW)),
        out_shape=jax.ShapeDtypeStruct((B, C, HWp), x.dtype),
        grid=(B,),
        in_specs=[
            pl.BlockSpec(memory_space=pltpu.MemorySpace.SMEM),   # snr: whole, scalar reads
            pl.BlockSpec((1, C, HWp), lambda b: (b, 0, 0)),      # x: one batch per step
            pl.BlockSpec((C, Ch), lambda b: (0, 0)),             # weights/biases:
            pl.BlockSpec((1, Ch), lambda b: (0, 0)),             #   constant block index
            pl.BlockSpec((1, Ch), lambda b: (0, 0)),             #   -> DMA'd once,
            pl.BlockSpec((Ch, C), lambda b: (0, 0)),             #   VMEM-resident
            pl.BlockSpec((1, C), lambda b: (0, 0)),
        ],
        out_specs=pl.BlockSpec((1, C, HWp), lambda b: (b, 0, 0)),
        compiler_params=pltpu.CompilerParams(
            dimension_semantics=("parallel",),       # batch shards across TCs on v7x
            vmem_limit_bytes=vmem_limit,
        ),
        cost_estimate=cost,
    )(snr, x2, params["w1x"], params["w1s"], params["b1"],
      params["w2"], params["b2"])

    if HWp != HW:
        out = out[:, :, :HW]
    return out.reshape(B, C, H, W)


def init_params(key, channels):
    assert channels >= 16, "channels // 16 must be >= 1 (as in the PyTorch module)"
    ch = channels // 16
    k1, k2, k3, k4 = jax.random.split(key, 4)
    # nn.Linear(channels+1, channels//16) weight is [out, in]; we store [in, out].
    w1 = jax.random.normal(k1, (channels + 1, ch), jnp.float32) * 0.1
    b1 = jax.random.normal(k2, (1, ch), jnp.float32) * 0.1
    w2 = jax.random.normal(k3, (ch, channels), jnp.float32) * 0.1
    b2 = jax.random.normal(k4, (1, channels), jnp.float32) * 0.1
    return {
        "w1x": w1[:channels, :],           # [C, Ch]
        "w1s": w1[channels:channels + 1],  # [1, Ch]
        "b1": b1,
        "w2": w2,
        "b2": b2,
    }


def af_layer_ref(x, snr, params):
    # Pure-JAX reference reproducing the PyTorch semantics exactly.
    pooled = jnp.mean(x, axis=(2, 3))                               # [B, C]
    y = jnp.concatenate([pooled, snr], axis=-1)                     # [B, C+1]
    w1 = jnp.concatenate([params["w1x"], params["w1s"]], axis=0)    # [C+1, Ch]
    h = jnp.maximum(y @ w1 + params["b1"], 0.0)
    g = jax.nn.sigmoid(h @ params["w2"] + params["b2"])             # [B, C]
    return x * g[:, :, None, None]


if __name__ == "__main__":
    key = jax.random.PRNGKey(0)
    kx, ks, kp, kx2 = jax.random.split(key, 4)

    # Shape 1: HW already a multiple of 128 (no padding path).
    B, C, H, W = 2, 32, 16, 16
    x = jax.random.normal(kx, (B, C, H, W), jnp.float32)
    snr = jax.random.uniform(ks, (B, 1), jnp.float32, 0.0, 20.0)
    params = init_params(kp, C)

    out = jax.block_until_ready(af_layer(x, snr, params))
    ref = af_layer_ref(x, snr, params)
    assert out.shape == (B, C, H, W)
    assert jnp.allclose(out, ref, atol=1e-5, rtol=1e-5), "mismatch vs reference (16x16)"

    # Shape 2: HW = 196 -> exercises lane padding to 256 + slice-back.
    H2, W2 = 14, 14
    x2 = jax.random.normal(kx2, (B, C, H2, W2), jnp.float32)
    out2 = jax.block_until_ready(af_layer(x2, snr, params))
    ref2 = af_layer_ref(x2, snr, params)
    assert out2.shape == (B, C, H2, W2)
    assert jnp.allclose(out2, ref2, atol=1e-5, rtol=1e-5), "mismatch vs reference (14x14)"

    print("KERNEL_OK")
</pallas_src>

<mosaic_0001>
module attributes {stable_mosaic.version = 11 : i64} {
  func.func @_af_kernel(%arg0: i32, %arg1: memref<2x1xf32, #tpu.memory_space<smem>>, %arg2: memref<1x32x256xf32, #tpu.memory_space<vmem>>, %arg3: memref<32x2xf32, #tpu.memory_space<vmem>>, %arg4: memref<1x2xf32, #tpu.memory_space<vmem>>, %arg5: memref<1x2xf32, #tpu.memory_space<vmem>>, %arg6: memref<2x32xf32, #tpu.memory_space<vmem>>, %arg7: memref<1x32xf32, #tpu.memory_space<vmem>>, %arg8: memref<1x32x256xf32, #tpu.memory_space<vmem>>) attributes {dimension_semantics = [#tpu.dimension_semantics<parallel>], iteration_bounds = array<i64: 2>, scalar_prefetch = 0 : i64, scratch_operands = 0 : i64, tpu.core_type = #tpu.core_type<tc>, window_params = [{transform_indices = @transform_0, window_bounds = array<i64: 2, 1>}, {transform_indices = @transform_1, window_bounds = array<i64: 1, 32, 256>}, {pipeline_mode = #tpu.pipeline_mode<synchronous>, transform_indices = @transform_2, window_bounds = array<i64: 32, 2>}, {pipeline_mode = #tpu.pipeline_mode<synchronous>, transform_indices = @transform_3, window_bounds = array<i64: 1, 2>}, {pipeline_mode = #tpu.pipeline_mode<synchronous>, transform_indices = @transform_4, window_bounds = array<i64: 1, 2>}, {pipeline_mode = #tpu.pipeline_mode<synchronous>, transform_indices = @transform_5, window_bounds = array<i64: 2, 32>}, {pipeline_mode = #tpu.pipeline_mode<synchronous>, transform_indices = @transform_6, window_bounds = array<i64: 1, 32>}, {transform_indices = @transform_7, window_bounds = array<i64: 1, 32, 256>}]} {
    %c0 = arith.constant 0 : index
    %c0_0 = arith.constant 0 : index
    %c0_1 = arith.constant 0 : index
    %0 = vector.load %arg2[%c0, %c0_0, %c0_1] : memref<1x32x256xf32, #tpu.memory_space<vmem>>, vector<1x32x256xf32>
    %cst = arith.constant dense<0.000000e+00> : vector<1x32xf32>
    %1 = vector.multi_reduction <add>, %0, %cst [2] : vector<1x32x256xf32> to vector<1x32xf32>
    %cst_2 = arith.constant 3.906250e-03 : f32
    %2 = vector.broadcast %cst_2 : f32 to vector<1x32xf32>
    %3 = arith.mulf %1, %2 : vector<1x32xf32>
    %4 = arith.index_cast %arg0 : i32 to index
    %c0_3 = arith.constant 0 : index
    %5 = memref.load %arg1[%4, %c0_3] : memref<2x1xf32, #tpu.memory_space<smem>>
    %c0_4 = arith.constant 0 : index
    %c0_5 = arith.constant 0 : index
    %6 = vector.load %arg3[%c0_4, %c0_5] : memref<32x2xf32, #tpu.memory_space<vmem>>, vector<32x2xf32>
    %cst_6 = arith.constant dense<0.000000e+00> : vector<1x2xf32>
    %7 = tpu.matmul %3, %6, %cst_6 {dimension_numbers = #tpu.dot_dimension_numbers<[1], [0], [0], [1], [0, 0, 1, 1], [], []>} : vector<1x32xf32>, vector<32x2xf32>, vector<1x2xf32> -> vector<1x2xf32>
    %c0_7 = arith.constant 0 : index
    %c0_8 = arith.constant 0 : index
    %8 = vector.load %arg4[%c0_7, %c0_8] : memref<1x2xf32, #tpu.memory_space<vmem>>, vector<1x2xf32>
    %9 = vector.broadcast %5 : f32 to vector<1x2xf32>
    %10 = arith.mulf %9, %8 : vector<1x2xf32>
    %11 = arith.addf %7, %10 : vector<1x2xf32>
    %c0_9 = arith.constant 0 : index
    %c0_10 = arith.constant 0 : index
    %12 = vector.load %arg5[%c0_9, %c0_10] : memref<1x2xf32, #tpu.memory_space<vmem>>, vector<1x2xf32>
    %13 = arith.addf %11, %12 : vector<1x2xf32>
    %cst_11 = arith.constant 0.000000e+00 : f32
    %14 = vector.broadcast %cst_11 : f32 to vector<1x2xf32>
    %15 = arith.maximumf %13, %14 : vector<1x2xf32>
    %c0_12 = arith.constant 0 : index
    %c0_13 = arith.constant 0 : index
    %16 = vector.load %arg6[%c0_12, %c0_13] : memref<2x32xf32, #tpu.memory_space<vmem>>, vector<2x32xf32>
    %cst_14 = arith.constant dense<0.000000e+00> : vector<1x32xf32>
    %17 = tpu.matmul %15, %16, %cst_14 {dimension_numbers = #tpu.dot_dimension_numbers<[1], [0], [0], [1], [0, 0, 1, 1], [], []>} : vector<1x2xf32>, vector<2x32xf32>, vector<1x32xf32> -> vector<1x32xf32>
    %c0_15 = arith.constant 0 : index
    %c0_16 = arith.constant 0 : index
    %18 = vector.load %arg7[%c0_15, %c0_16] : memref<1x32xf32, #tpu.memory_space<vmem>>, vector<1x32xf32>
    %19 = arith.addf %17, %18 : vector<1x32xf32>
    %20 = arith.negf %19 : vector<1x32xf32>
    %21 = math.exp %20 : vector<1x32xf32>
    %cst_17 = arith.constant 1.000000e+00 : f32
    %22 = vector.broadcast %cst_17 : f32 to vector<1x32xf32>
    %23 = arith.addf %22, %21 : vector<1x32xf32>
    %24 = arith.divf %22, %23 : vector<1x32xf32>
    %c0_18 = arith.constant 0 : index
    %c0_19 = arith.constant 0 : index
    %c0_20 = arith.constant 0 : index
    %25 = vector.load %arg2[%c0_18, %c0_19, %c0_20] : memref<1x32x256xf32, #tpu.memory_space<vmem>>, vector<1x32x256xf32>
    %26 = vector.shape_cast %24 : vector<1x32xf32> to vector<1x32x1xf32>
    %27 = vector.broadcast %26 : vector<1x32x1xf32> to vector<1x32x256xf32>
    %28 = arith.mulf %25, %27 : vector<1x32x256xf32>
    %c0_21 = arith.constant 0 : index
    %c0_22 = arith.constant 0 : index
    %c0_23 = arith.constant 0 : index
    %29 = vector.load %arg8[%c0_21, %c0_22, %c0_23] : memref<1x32x256xf32, #tpu.memory_space<vmem>>, vector<1x32x256xf32>
    tpu.vector_store %arg8[%c0_21, %c0_22, %c0_23], %28 {strides = array<i32>} : memref<1x32x256xf32, #tpu.memory_space<vmem>>, vector<1x32x256xf32>,
    return
  }
  func.func @transform_0(%arg0: i32) -> (i32, i32) {
    %c0_i32 = arith.constant 0 : i32
    %c0_i32_0 = arith.constant 0 : i32
    %c0_i32_1 = arith.constant 0 : i32
    return %c0_i32, %c0_i32_0 : i32, i32
  }
  func.func @transform_1(%arg0: i32) -> (i32, i32, i32) {
    %c0_i32 = arith.constant 0 : i32
    %c0_i32_0 = arith.constant 0 : i32
    %c0_i32_1 = arith.constant 0 : i32
    return %arg0, %c0_i32, %c0_i32_0 : i32, i32, i32
  }
  func.func @transform_2(%arg0: i32) -> (i32, i32) {
    %c0_i32 = arith.constant 0 : i32
    %c0_i32_0 = arith.constant 0 : i32
    %c0_i32_1 = arith.constant 0 : i32
    return %c0_i32, %c0_i32_0 : i32, i32
  }
  func.func @transform_3(%arg0: i32) -> (i32, i32) {
    %c0_i32 = arith.constant 0 : i32
    %c0_i32_0 = arith.constant 0 : i32
    %c0_i32_1 = arith.constant 0 : i32
    return %c0_i32, %c0_i32_0 : i32, i32
  }
  func.func @transform_4(%arg0: i32) -> (i32, i32) {
    %c0_i32 = arith.constant 0 : i32
    %c0_i32_0 = arith.constant 0 : i32
    %c0_i32_1 = arith.constant 0 : i32
    return %c0_i32, %c0_i32_0 : i32, i32
  }
  func.func @transform_5(%arg0: i32) -> (i32, i32) {
    %c0_i32 = arith.constant 0 : i32
    %c0_i32_0 = arith.constant 0 : i32
    %c0_i32_1 = arith.constant 0 : i32
    return %c0_i32, %c0_i32_0 : i32, i32
  }
  func.func @transform_6(%arg0: i32) -> (i32, i32) {
    %c0_i32 = arith.constant 0 : i32
    %c0_i32_0 = arith.constant 0 : i32
    %c0_i32_1 = arith.constant 0 : i32
    return %c0_i32, %c0_i32_0 : i32, i32
  }
  func.func @transform_7(%arg0: i32) -> (i32, i32, i32) {
    %c0_i32 = arith.constant 0 : i32
    %c0_i32_0 = arith.constant 0 : i32
    %c0_i32_1 = arith.constant 0 : i32
    return %arg0, %c0_i32, %c0_i32_0 : i32, i32, i32
  }
}

</mosaic_0001>

<llo_original>
// kernel: tpu_custom_call.1
$region0: #{tpu_custom_call.1}
  #allocation0 [shape = 'u32[]', space=smem, size = 0x4, offset = 0x4, fixed_abs, tag = 'smem constant byte address 0x4 - core index']
  #allocation1 [shape = 'u32[144,128]{1,0:T(1,128)}', space=vmem, size = 0x12000, scoped, tag = 'internal scratch']
  %s0 = inlined_call_operand.vmem [shape: f32[2,1], index: 0, kind: input, shape index: {}]
  %s1 = inlined_call_operand.hbm [shape: f32[2,32,256], index: 1, kind: input, shape index: {}]
  %s2 = inlined_call_operand.vmem [shape: f32[32,2], index: 2, kind: input, shape index: {}]
  %s3 = inlined_call_operand.vmem [shape: f32[1,2], index: 3, kind: input, shape index: {}]
  %s4 = inlined_call_operand.vmem [shape: f32[1,2], index: 4, kind: input, shape index: {}]
  %s5 = inlined_call_operand.vmem [shape: f32[2,32], index: 5, kind: input, shape index: {}]
  %s6 = inlined_call_operand.vmem [shape: f32[1,32], index: 6, kind: input, shape index: {}]
  %s7 = inlined_call_operand.hbm [shape: f32[2,32,256], index: 7, kind: output, shape index: {}]
  %s8 = sld [smem:[#allocation0]]
  $region69: #{tpu_custom_call.1} parent=0
    _
  %s10 = ssub.s32 1, %s8
  %s11 = scalar_select 0, %s10, %s8
  $region1: #{tpu_custom_call.1} parent=0
    #allocation2 [shape = 'u8[1024]{0}', space=smem, size = 0x400, scoped, tag = 'input window, operand 0, single buffered']
    #allocation3 [shape = 's32[2]{0}', space=sflag, size = 0x8, scoped, tag = 'scoped memory for tpu_custom_call.1']
    #allocation4 [shape = 's32[2]{0}', space=sflag, size = 0x8, scoped, tag = 'scoped memory for tpu_custom_call.1']
    #allocation5 [shape = 's32[2]{0}', space=sflag, size = 0x8, scoped, tag = 'scoped memory for tpu_custom_call.1']
    #allocation6 [shape = 'u8[65536]{0}', space=vmem, size = 0x10000, scoped, tag = 'input window, operand 1']
    #allocation7 [shape = 'u8[65536]{0}', space=vmem, size = 0x10000, scoped, tag = 'output window, operand 0']
    %12 = vsyncpa [#allocation5], 0
    %13 = vsyncpa [#allocation3], 0
    %s14 = scalar_lea.sflag [#allocation3], 1
    %15 = vsyncpa %s14, 0
    %16 = vsyncpa [#allocation4], 0
    %s17 = scalar_lea.sflag [#allocation4], 1
    %18 = vsyncpa %s17, 0
    loop: start=0, step=1, limit=4
    $region2: #{tpu_custom_call.1} parent=1 // loop_pre_header
      _
    $region3: #{tpu_custom_call.1} parent=1 // loop_header
      %s20 = sphi 0, %s24
      %p21 = scmp.ge.s32.totalorder %s20, 4
      %s28 = sphi 0, %s28
      %s30 = sphi 0, %s28
      %s31 = sphi 0, %s30
      %s45 = sphi 0, %s31
      %s51 = sphi 0, %s53
      %s54 = sphi 0, %s51
      %s55 = sphi 0, %s54
      %s71 = sphi 0, %s55
      %s75 = sphi 0, %s75
      %s77 = sphi 0, %s75
      %s78 = sphi 0, %s77
      %s92 = sphi 0, %s78
      %s96 = sphi 0, %s96
      %s98 = sphi 0, %s96
      %s99 = sphi 0, %s98
      %s113 = sphi 0, %s99
      %s117 = sphi 0, %s117
      %s119 = sphi 0, %s117
      %s120 = sphi 0, %s119
      %s134 = sphi 0, %s120
      %s138 = sphi 0, %s138
      %s140 = sphi 0, %s138
      %s141 = sphi 0, %s140
      %s155 = sphi 0, %s141
      %s159 = sphi 0, %s159
      %s161 = sphi 0, %s159
      %s162 = sphi 0, %s161
      %s176 = sphi 0, %s162
      %s182 = sphi 0, %s184
      %s185 = sphi 0, %s182
      %s186 = sphi 0, %s185
      %s202 = sphi 0, %s186
    $region4: #{tpu_custom_call.1} parent=1 // loop_header_branch
      %23 = sbr.rel (%p21) target = $region8
    $region5: #{tpu_custom_call.1} parent=1 // loop_body
      %s25 = ssub.s32 %s20, 1
      %s26 = ssub.s32 %s20, 2
      %s27 = sadd.s32 %s20, 1
      %s29 = sadd.s32 %s28, 1
      %p32 = scmp.eq.s32.totalorder %s20, 1
      %p33 = scmp.ne.s32.totalorder %s28, %s30
      %p34 = scmp.eq.s32.totalorder %s20, 0
      %p35 = por %p33, %p34
      %p36 = scmp.ne.s32.totalorder %s28, %s30
      %p37 = scmp.eq.s32.totalorder %s25, 1
      %p38 = por %p36, %p37
      %p39 = scmp.ne.s32.totalorder %s30, %s31
      %p40 = scmp.eq.s32.totalorder %s25, 0
      %p41 = por %p39, %p40
      %p42 = scmp.ne.s32.totalorder %s30, %s31
      %p43 = scmp.eq.s32.totalorder %s26, 1
      %p44 = por %p42, %p43
      %p46 = scmp.ne.s32.totalorder %s31, %s45
      %p47 = scmp.eq.s32.totalorder %s26, 0
      %p48 = por %p46, %p47
      %s49 = ssub.s32 %s20, %s27
      %p50 = scmp.eq.s32.totalorder %s49, 0
      %s52 = sadd.s32 %s51, 1
      %s53 = scalar_select %p50, %s51, %s52
      %p56 = pneg %p50
      %p57 = scmp.eq.s32.totalorder %s20, 1
      %p58 = por %p56, %p57
      %p59 = scmp.ne.s32.totalorder %s51, %s54
      %p60 = scmp.eq.s32.totalorder %s20, 0
      %p61 = por %p59, %p60
      %p62 = scmp.ne.s32.totalorder %s51, %s54
      %p63 = scmp.eq.s32.totalorder %s25, 1
      %p64 = por %p62, %p63
      %p65 = scmp.ne.s32.totalorder %s54, %s55
      %p66 = scmp.eq.s32.totalorder %s25, 0
      %p67 = por %p65, %p66
      %p68 = scmp.ne.s32.totalorder %s54, %s55
      %p69 = scmp.eq.s32.totalorder %s26, 1
      %p70 = por %p68, %p69
      %p72 = scmp.ne.s32.totalorder %s55, %s71
      %p73 = scmp.eq.s32.totalorder %s26, 0
      %p74 = por %p72, %p73
      %s76 = sadd.s32 %s75, 1
      %p79 = scmp.eq.s32.totalorder %s20, 1
      %p80 = scmp.ne.s32.totalorder %s75, %s77
      %p81 = scmp.eq.s32.totalorder %s20, 0
      %p82 = por %p80, %p81
      %p83 = scmp.ne.s32.totalorder %s75, %s77
      %p84 = scmp.eq.s32.totalorder %s25, 1
      %p85 = por %p83, %p84
      %p86 = scmp.ne.s32.totalorder %s77, %s78
      %p87 = scmp.eq.s32.totalorder %s25, 0
      %p88 = por %p86, %p87
      %p89 = scmp.ne.s32.totalorder %s77, %s78
      %p90 = scmp.eq.s32.totalorder %s26, 1
      %p91 = por %p89, %p90
      %p93 = scmp.ne.s32.totalorder %s78, %s92
      %p94 = scmp.eq.s32.totalorder %s26, 0
      %p95 = por %p93, %p94
      %s97 = sadd.s32 %s96, 1
      %p100 = scmp.eq.s32.totalorder %s20, 1
      %p101 = scmp.ne.s32.totalorder %s96, %s98
      %p102 = scmp.eq.s32.totalorder %s20, 0
      %p103 = por %p101, %p102
      %p104 = scmp.ne.s32.totalorder %s96, %s98
      %p105 = scmp.eq.s32.totalorder %s25, 1
      %p106 = por %p104, %p105
      %p107 = scmp.ne.s32.totalorder %s98, %s99
      %p108 = scmp.eq.s32.totalorder %s25, 0
      %p109 = por %p107, %p108
      %p110 = scmp.ne.s32.totalorder %s98, %s99
      %p111 = scmp.eq.s32.totalorder %s26, 1
      %p112 = por %p110, %p111
      %p114 = scmp.ne.s32.totalorder %s99, %s113
      %p115 = scmp.eq.s32.totalorder %s26, 0
      %p116 = por %p114, %p115
      %s118 = sadd.s32 %s117, 1
      %p121 = scmp.eq.s32.totalorder %s20, 1
      %p122 = scmp.ne.s32.totalorder %s117, %s119
      %p123 = scmp.eq.s32.totalorder %s20, 0
      %p124 = por %p122, %p123
      %p125 = scmp.ne.s32.totalorder %s117, %s119
      %p126 = scmp.eq.s32.totalorder %s25, 1
      %p127 = por %p125, %p126
      %p128 = scmp.ne.s32.totalorder %s119, %s120
      %p129 = scmp.eq.s32.totalorder %s25, 0
      %p130 = por %p128, %p129
      %p131 = scmp.ne.s32.totalorder %s119, %s120
      %p132 = scmp.eq.s32.totalorder %s26, 1
      %p133 = por %p131, %p132
      %p135 = scmp.ne.s32.totalorder %s120, %s134
      %p136 = scmp.eq.s32.totalorder %s26, 0
      %p137 = por %p135, %p136
      %s139 = sadd.s32 %s138, 1
      %p142 = scmp.eq.s32.totalorder %s20, 1
      %p143 = scmp.ne.s32.totalorder %s138, %s140
      %p144 = scmp.eq.s32.totalorder %s20, 0
      %p145 = por %p143, %p144
      %p146 = scmp.ne.s32.totalorder %s138, %s140
      %p147 = scmp.eq.s32.totalorder %s25, 1
      %p148 = por %p146, %p147
      %p149 = scmp.ne.s32.totalorder %s140, %s141
      %p150 = scmp.eq.s32.totalorder %s25, 0
      %p151 = por %p149, %p150
      %p152 = scmp.ne.s32.totalorder %s140, %s141
      %p153 = scmp.eq.s32.totalorder %s26, 1
      %p154 = por %p152, %p153
      %p156 = scmp.ne.s32.totalorder %s141, %s155
      %p157 = scmp.eq.s32.totalorder %s26, 0
      %p158 = por %p156, %p157
      %s160 = sadd.s32 %s159, 1
      %p163 = scmp.eq.s32.totalorder %s20, 1
      %p164 = scmp.ne.s32.totalorder %s159, %s161
      %p165 = scmp.eq.s32.totalorder %s20, 0
      %p166 = por %p164, %p165
      %p167 = scmp.ne.s32.totalorder %s159, %s161
      %p168 = scmp.eq.s32.totalorder %s25, 1
      %p169 = por %p167, %p168
      %p170 = scmp.ne.s32.totalorder %s161, %s162
      %p171 = scmp.eq.s32.totalorder %s25, 0
      %p172 = por %p170, %p171
      %p173 = scmp.ne.s32.totalorder %s161, %s162
      %p174 = scmp.eq.s32.totalorder %s26, 1
      %p175 = por %p173, %p174
      %p177 = scmp.ne.s32.totalorder %s162, %s176
      %p178 = scmp.eq.s32.totalorder %s26, 0
      %p179 = por %p177, %p178
      %s180 = ssub.s32 %s20, %s27
      %p181 = scmp.eq.s32.totalorder %s180, 0
      %s183 = sadd.s32 %s182, 1
      %s184 = scalar_select %p181, %s182, %s183
      %p187 = pneg %p181
      %p188 = scmp.eq.s32.totalorder %s20, 1
      %p189 = por %p187, %p188
      %p190 = scmp.ne.s32.totalorder %s182, %s185
      %p191 = scmp.eq.s32.totalorder %s20, 0
      %p192 = por %p190, %p191
      %p193 = scmp.ne.s32.totalorder %s182, %s185
      %p194 = scmp.eq.s32.totalorder %s25, 1
      %p195 = por %p193, %p194
      %p196 = scmp.ne.s32.totalorder %s185, %s186
      %p197 = scmp.eq.s32.totalorder %s25, 0
      %p198 = por %p196, %p197
      %p199 = scmp.ne.s32.totalorder %s185, %s186
      %p200 = scmp.eq.s32.totalorder %s26, 1
      %p201 = por %p199, %p200
      %p203 = scmp.ne.s32.totalorder %s186, %s202
      %p204 = scmp.eq.s32.totalorder %s26, 0
      %p205 = por %p203, %p204
      %p206 = scmp.le.s32.totalorder 1, %s20
      %p207 = scmp.lt.s32.totalorder %s20, 3
      %p208 = pnand %p206, %p207
      %p209 = pneg %p208
      // Predicated region
      $region9: #{tpu_custom_call.1} parent=5 // pred_check
        _
      $region10: #{tpu_custom_call.1} parent=5 // pred_check_branch
        %211 = sbr.rel (%p208) target = $region12
      $region11: #{tpu_custom_call.1} parent=5 // pred_region
        %s212 = ssub.s32 %s20, 1
        // Predicated region
        $region13: #{tpu_custom_call.1} parent=11 // pred_check
          %p213 = pneg %p41
        $region14: #{tpu_custom_call.1} parent=11 // pred_check_branch
          %215 = sbr.rel (%p213) target = $region16
        $region15: #{tpu_custom_call.1} parent=11 // pred_region
          %s217 = ssub.s32 32, 32
          %218 = vsyncadd [#allocation5], %s217
          %s220 = sshll.u32 %s0, 4
          %s221 = int_to_ptr.vmem [resolvable:$true] %s220
          %223 = dma.vmem_to_smem %s221, 32, [#allocation2], [#allocation5]
        $region16: #{tpu_custom_call.1} parent=11 // pred_fallthru
          _
        // Predicated region
        $region17: #{tpu_custom_call.1} parent=11 // pred_check
          %p224 = pneg %p88
        $region18: #{tpu_custom_call.1} parent=11 // pred_check_branch
          %226 = sbr.rel (%p224) target = $region20
        $region19: #{tpu_custom_call.1} parent=11 // pred_region
          _
        $region20: #{tpu_custom_call.1} parent=11 // pred_fallthru
          _
        // Predicated region
        $region21: #{tpu_custom_call.1} parent=11 // pred_check
          %p227 = pneg %p109
        $region22: #{tpu_custom_call.1} parent=11 // pred_check_branch
          %229 = sbr.rel (%p227) target = $region24
        $region23: #{tpu_custom_call.1} parent=11 // pred_region
          _
        $region24: #{tpu_custom_call.1} parent=11 // pred_fallthru
          _
        // Predicated region
        $region25: #{tpu_custom_call.1} parent=11 // pred_check
          %p230 = pneg %p130
        $region26: #{tpu_custom_call.1} parent=11 // pred_check_branch
          %232 = sbr.rel (%p230) target = $region28
        $region27: #{tpu_custom_call.1} parent=11 // pred_region
          _
        $region28: #{tpu_custom_call.1} parent=11 // pred_fallthru
          _
        // Predicated region
        $region29: #{tpu_custom_call.1} parent=11 // pred_check
          %p233 = pneg %p151
        $region30: #{tpu_custom_call.1} parent=11 // pred_check_branch
          %235 = sbr.rel (%p233) target = $region32
        $region31: #{tpu_custom_call.1} parent=11 // pred_region
          _
        $region32: #{tpu_custom_call.1} parent=11 // pred_fallthru
          _
        // Predicated region
        $region33: #{tpu_custom_call.1} parent=11 // pred_check
          %p236 = pneg %p172
        $region34: #{tpu_custom_call.1} parent=11 // pred_check_branch
          %238 = sbr.rel (%p236) target = $region36
        $region35: #{tpu_custom_call.1} parent=11 // pred_region
          _
        $region36: #{tpu_custom_call.1} parent=11 // pred_fallthru
          _
      $region12: #{tpu_custom_call.1} parent=5 // pred_fallthru
        _
      %p239 = scmp.lt.s32.totalorder %s20, 2
      // Predicated region
      $region37: #{tpu_custom_call.1} parent=5 // pred_check
        %p240 = pneg %p239
      $region38: #{tpu_custom_call.1} parent=5 // pred_check_branch
        %242 = sbr.rel (%p240) target = $region40
      $region39: #{tpu_custom_call.1} parent=5 // pred_region
        // Predicated region
        $region41: #{tpu_custom_call.1} parent=39 // pred_check
          %p243 = pneg %p61
        $region42: #{tpu_custom_call.1} parent=39 // pred_check_branch
          %245 = sbr.rel (%p243) target = $region44
        $region43: #{tpu_custom_call.1} parent=39 // pred_region
          %s246 = sand.u32 %s51, 1
          %s247 = scalar_lea.sflag [#allocation3], %s246
          %s248 = sand.u32 %s51, 1
          %s249 = smul.addr %s248, 64
          %s250 = scalar_lea.vmem [#allocation6], %s249
          %s252 = ssub.s32 1024, 1024
          %253 = vsyncadd %s247, %s252
          %s254 = smul.addr %s20, 8
          %s255 = smul.addr %s254, 128
          %s256 = scalar_lea.hbm %s1, %s255
          %s257 = sshll.u32 %s250, 4
          %s258 = int_to_ptr.vmem [resolvable:$true] %s257
          %263 = dma.hbm_to_vmem [thread:$0]  %s256, 1024, %s258, %s247, 256, 256, 16
        $region44: #{tpu_custom_call.1} parent=39 // pred_fallthru
          _
      $region40: #{tpu_custom_call.1} parent=5 // pred_fallthru
        _
      %p264 = scmp.le.s32.totalorder 1, %s20
      %p265 = scmp.lt.s32.totalorder %s20, 3
      %p266 = pnand %p264, %p265
      %p267 = pneg %p266
      // Predicated region
      $region45: #{tpu_custom_call.1} parent=5 // pred_check
        _
      $region46: #{tpu_custom_call.1} parent=5 // pred_check_branch
        %269 = sbr.rel (%p266) target = $region48
      $region47: #{tpu_custom_call.1} parent=5 // pred_region
        %s270 = ssub.s32 %s20, 1
        // Predicated region
        $region49: #{tpu_custom_call.1} parent=47 // pred_check
          %p271 = pneg %p41
        $region50: #{tpu_custom_call.1} parent=47 // pred_check_branch
          %273 = sbr.rel (%p271) target = $region52
        $region51: #{tpu_custom_call.1} parent=47 // pred_region
          %274 = dma.done [#allocation5], 32
        $region52: #{tpu_custom_call.1} parent=47 // pred_fallthru
          _
        %s275 = sand.u32 %s54, 1
        %s276 = scalar_lea.sflag [#allocation3], %s275
        %s277 = sand.u32 %s54, 1
        %s278 = smul.addr %s277, 64
        %s279 = scalar_lea.vmem [#allocation6], %s278
        // Predicated region
        $region53: #{tpu_custom_call.1} parent=47 // pred_check
          %p280 = pneg %p67
        $region54: #{tpu_custom_call.1} parent=47 // pred_check_branch
          %282 = sbr.rel (%p280) target = $region56
        $region55: #{tpu_custom_call.1} parent=47 // pred_region
          %283 = dma.done %s276, 1024
        $region56: #{tpu_custom_call.1} parent=47 // pred_fallthru
          _
        %284 = sfence
        %p285 = pneg %p41
        %p286 = pneg %p38
        %s287 = sand.u32 %s54, 1
        %s288 = scalar_lea.sflag [#allocation3], %s287
        %s289 = sand.u32 %s54, 1
        %s290 = smul.addr %s289, 64
        %s291 = scalar_lea.vmem [#allocation6], %s290
        %p292 = pneg %p67
        %p293 = pneg %p64
        %p294 = pneg %p88
        %p295 = pneg %p85
        %p296 = pneg %p109
        %p297 = pneg %p106
        %p298 = pneg %p130
        %p299 = pneg %p127
        %p300 = pneg %p151
        %p301 = pneg %p148
        %p302 = pneg %p172
        %p303 = pneg %p169
        %p304 = pneg %p198
        %p305 = pneg %p195
        %s306 = sand.u32 %s185, 1
        %s307 = scalar_lea.sflag [#allocation4], %s306
        %s308 = sand.u32 %s185, 1
        %s309 = smul.addr %s308, 64
        %s310 = scalar_lea.vmem [#allocation7], %s309
        %v311 = vld [vmem:[%s279] sm:$0xff]
        %v312 = vld [vmem:[%s279 + $0x8] sm:$0xff]
        %v313 = vld [vmem:[%s279 + $0x10] sm:$0xff]
        %v314 = vld [vmem:[%s279 + $0x18] sm:$0xff]
        %v315 = vld [vmem:[%s279 + $0x20] sm:$0xff]
        %v316 = vld [vmem:[%s279 + $0x28] sm:$0xff]
        %v317 = vld [vmem:[%s279 + $0x30] sm:$0xff]
        %v318 = vld [vmem:[%s279 + $0x38] sm:$0xff]
        %v319 = vadd.f32 %v311, %v312
        %320 = vadd.xlane.f32.xlu0 %v319
        %v321 = vpop.xlane.xlu0 %320
        %v322 = vadd.f32 %v313, %v314
        %323 = vadd.xlane.f32.xlu0 %v322
        %v324 = vpop.xlane.xlu0 %323
        %v325 = vadd.f32 %v315, %v316
        %326 = vadd.xlane.f32.xlu0 %v325
        %v327 = vpop.xlane.xlu0 %326
        %v328 = vadd.f32 %v317, %v318
        %329 = vadd.xlane.f32.xlu0 %v328
        %v330 = vpop.xlane.xlu0 %329
        %v331 = vmul.f32 %v321, 0.00390625
        %v332 = vmul.f32 %v324, 0.00390625
        %v333 = vmul.f32 %v327, 0.00390625
        %v334 = vmul.f32 %v330, 0.00390625
        %s335 = smul.u32 %s25, 128
        %s336 = sld [smem:[#allocation2 + %s335]]
        %v337 = vld [vmem:[%s2] sm:$0xff]
        %v338 = vld [vmem:[%s2 + $0x8] sm:$0xff]
        %v339 = vld [vmem:[%s2 + $0x10] sm:$0xff]
        %v340 = vld [vmem:[%s2 + $0x18] sm:$0xff]
        %v341 = vld [vmem:[%s3] sm:$0x1]
        %v342 = vstv %s336
        %v343 = vmul.f32 %v342, %v341
        %v348 = vlaneseq
        %v349 = vand.u32 %v348, 127
        %v350 = vlaneseq
        %v351 = vshrl.u32 %v350, 7
        %v352 = vsub.s32 %v349, %v351
        %v353 = vrot.slane %v331, %v352
        %v354 = vadd.s32 %v349, 4294967288
        %v355 = vlaneseq
        %v356 = vshrl.u32 %v355, 7
        %v357 = vsub.s32 %v354, %v356
        %v358 = vrot.slane %v332, %v357
        %vm359 = vcmask 130112
        %v360 = vsel %vm359, %v358, %v353
        %v361 = vadd.s32 %v349, 4294967280
        %v362 = vlaneseq
        %v363 = vshrl.u32 %v362, 7
        %v364 = vsub.s32 %v361, %v363
        %v365 = vrot.slane %v333, %v364
        %vm366 = vcmask 195712
        %v367 = vsel %vm366, %v365, %v360
        %v368 = vadd.s32 %v349, 4294967272
        %v369 = vlaneseq
        %v370 = vshrl.u32 %v369, 7
        %v371 = vsub.s32 %v368, %v370
        %v372 = vrot.slane %v334, %v371
        %vm373 = vcmask 261312
        %v374 = vsel %vm373, %v372, %v367
        %vm375 = vcmask 261120
        %v376 = vsel %vm375, %v374, 0
        %378 = vmatprep.subr.mxu0 0.0
        %379 = vmatpush1.msra.mxu0 %v337
        %380 = vmatprep.subr.mxu0 0.0
        %381 = vmatpush1.msra.mxu0 %v338
        %382 = vmatprep.subr.mxu0 0.0
        %383 = vmatpush1.msra.mxu0 %v339
        %384 = vmatprep.subr.mxu0 0.0
        %385 = vmatpush1.msra.mxu0 %v340
        %386 = vmatprep.subr.mxu0 0.0
        %387 = vmatpush1.msra.mxu0 0.0
        %388 = vmatprep.subr.mxu0 0.0
        %389 = vmatpush1.msra.mxu0 0.0
        %390 = vmatprep.subr.mxu0 0.0
        %391 = vmatpush1.msra.mxu0 0.0
        %392 = vmatprep.subr.mxu0 0.0
        %393 = vmatpush1.msra.mxu0 0.0
        %394 = vmatprep.subr.mxu0 0.0
        %395 = vmatpush1.msra.mxu0 0.0
        %396 = vmatprep.subr.mxu0 0.0
        %397 = vmatpush1.msra.mxu0 0.0
        %398 = vmatprep.subr.mxu0 0.0
        %399 = vmatpush1.msra.mxu0 0.0
        %400 = vmatprep.subr.mxu0 0.0
        %401 = vmatpush1.msra.mxu0 0.0
        %402 = vmatprep.subr.mxu0 0.0
        %403 = vmatpush1.msra.mxu0 0.0
        %404 = vmatprep.subr.mxu0 0.0
        %405 = vmatpush1.msra.mxu0 0.0
        %406 = vmatprep.subr.mxu0 0.0
        %407 = vmatpush1.msra.mxu0 0.0
        %408 = vmatprep.subr.mxu0 0.0
        %409 = vmatpush1.msra.mxu0 0.0
        %410 = vmatprep.subr.mxu0 0.0
        %411 = vmatpush1.msra.mxu0 0.0
        %412 = vmatprep.subr.mxu0 0.0
        %413 = vmatpush1.msra.mxu0 0.0
        %414 = vmatprep.subr.mxu0 0.0
        %415 = vmatpush1.msra.mxu0 0.0
        %416 = vmatprep.subr.mxu0 0.0
        %417 = vmatpush1.msra.mxu0 0.0
        %418 = vmatprep.subr.mxu0 0.0
        %419 = vmatpush1.msra.mxu0 0.0
        %420 = vmatprep.subr.mxu0 0.0
        %421 = vmatpush1.msra.mxu0 0.0
        %422 = vmatprep.subr.mxu0 0.0
        %423 = vmatpush1.msra.mxu0 0.0
        %424 = vmatprep.subr.mxu0 0.0
        %425 = vmatpush1.msra.mxu0 0.0
        %426 = vmatprep.subr.mxu0 0.0
        %427 = vmatpush1.msra.mxu0 0.0
        %428 = vmatprep.subr.mxu0 0.0
        %429 = vmatpush1.msra.mxu0 0.0
        %430 = vmatprep.subr.mxu0 0.0
        %431 = vmatpush1.msra.mxu0 0.0
        %432 = vmatprep.subr.mxu0 0.0
        %433 = vmatpush1.msra.mxu0 0.0
        %434 = vmatprep.subr.mxu0 0.0
        %435 = vmatpush1.msra.mxu0 0.0
        %436 = vmatprep.subr.mxu0 0.0
        %437 = vmatpush1.msra.mxu0 0.0
        %438 = vmatprep.subr.mxu0 0.0
        %439 = vmatpush1.msra.mxu0 0.0
        %440 = vmatprep.subr.mxu0 0.0
        %441 = vmatpush1.msra.mxu0 0.0
        %442 = vmatprep.mubr.f32.mxu0 0.0
        %443 = vmatmul.mubr.f32.gmra.mrb[0].mxu0 %v376
        %v444 = vpop.f32.mrb[0].mxu0
        %v445 = vadd.f32 %v343, %v444
        %v446 = vpop.f32.mrb[0].mxu0
        %447 = vdwg.mxu0
        %v448 = vld [vmem:[%s4] sm:$0x1]
        %v449 = vadd.f32 %v445, %v448
        %v450 = vmax.f32 %v449, 0.0
        %v451 = vld [vmem:[%s5] sm:$0x3]
        %v452 = vld [vmem:[%s6] sm:$0x1]
        %vm453 = vcmask 15360
        %v455 = vsel %vm453, %v450, 0
        %vm457 = vcmask 1041408
        %v459 = vsel %vm457, %v451, 0
        %461 = vmatprep.subr.mxu0 0.0
        %462 = vmatpush1.msra.mxu0 %v459
        %463 = vmatprep.subr.mxu0 0.0
        %464 = vmatpush1.msra.mxu0 0.0
        %465 = vmatprep.subr.mxu0 0.0
        %466 = vmatpush1.msra.mxu0 0.0
        %467 = vmatprep.subr.mxu0 0.0
        %468 = vmatpush1.msra.mxu0 0.0
        %469 = vmatprep.subr.mxu0 0.0
        %470 = vmatpush1.msra.mxu0 0.0
        %471 = vmatprep.subr.mxu0 0.0
        %472 = vmatpush1.msra.mxu0 0.0
        %473 = vmatprep.subr.mxu0 0.0
        %474 = vmatpush1.msra.mxu0 0.0
        %475 = vmatprep.subr.mxu0 0.0
        %476 = vmatpush1.msra.mxu0 0.0
        %477 = vmatprep.subr.mxu0 0.0
        %478 = vmatpush1.msra.mxu0 0.0
        %479 = vmatprep.subr.mxu0 0.0
        %480 = vmatpush1.msra.mxu0 0.0
        %481 = vmatprep.subr.mxu0 0.0
        %482 = vmatpush1.msra.mxu0 0.0
        %483 = vmatprep.subr.mxu0 0.0
        %484 = vmatpush1.msra.mxu0 0.0
        %485 = vmatprep.subr.mxu0 0.0
        %486 = vmatpush1.msra.mxu0 0.0
        %487 = vmatprep.subr.mxu0 0.0
        %488 = vmatpush1.msra.mxu0 0.0
        %489 = vmatprep.subr.mxu0 0.0
        %490 = vmatpush1.msra.mxu0 0.0
        %491 = vmatprep.subr.mxu0 0.0
        %492 = vmatpush1.msra.mxu0 0.0
        %493 = vmatprep.subr.mxu0 0.0
        %494 = vmatpush1.msra.mxu0 0.0
        %495 = vmatprep.subr.mxu0 0.0
        %496 = vmatpush1.msra.mxu0 0.0
        %497 = vmatprep.subr.mxu0 0.0
        %498 = vmatpush1.msra.mxu0 0.0
        %499 = vmatprep.subr.mxu0 0.0
        %500 = vmatpush1.msra.mxu0 0.0
        %501 = vmatprep.subr.mxu0 0.0
        %502 = vmatpush1.msra.mxu0 0.0
        %503 = vmatprep.subr.mxu0 0.0
        %504 = vmatpush1.msra.mxu0 0.0
        %505 = vmatprep.subr.mxu0 0.0
        %506 = vmatpush1.msra.mxu0 0.0
        %507 = vmatprep.subr.mxu0 0.0
        %508 = vmatpush1.msra.mxu0 0.0
        %509 = vmatprep.subr.mxu0 0.0
        %510 = vmatpush1.msra.mxu0 0.0
        %511 = vmatprep.subr.mxu0 0.0
        %512 = vmatpush1.msra.mxu0 0.0
        %513 = vmatprep.subr.mxu0 0.0
        %514 = vmatpush1.msra.mxu0 0.0
        %515 = vmatprep.subr.mxu0 0.0
        %516 = vmatpush1.msra.mxu0 0.0
        %517 = vmatprep.subr.mxu0 0.0
        %518 = vmatpush1.msra.mxu0 0.0
        %519 = vmatprep.subr.mxu0 0.0
        %520 = vmatpush1.msra.mxu0 0.0
        %521 = vmatprep.subr.mxu0 0.0
        %522 = vmatpush1.msra.mxu0 0.0
        %523 = vmatprep.subr.mxu0 0.0
        %524 = vmatpush1.msra.mxu0 0.0
        %525 = vmatprep.mubr.f32.mxu0 0.0
        %526 = vmatmul.mubr.f32.gmra.mrb[0].mxu0 %v455
        %v527 = vpop.f32.mrb[0].mxu0
        %v528 = vadd.f32 %v452, %v527
        %v529 = vpop.f32.mrb[0].mxu0
        %530 = vdwg.mxu0
        %v531 = vxor.u32 %v528, 2147483648
        %v532 = vmul.f32 %v531, 1.442695
        %v533 = vpow.pop %v532
        %v534 = vadd.f32 %v533, 1.0
        %v535 = vrcp.pop %v534
        %v536 = vmul.f32 1.0, %v535
        %v537 = vlaneseq
        %v538 = vshrl.u32 %v537, 7
        %v539 = vsub.s32 0, %v538
        %v540 = vrot.slane %v536, %v539
        %542 = vbcast.lane.b32.xlu0 %v540, 256
        %v543 = vpop.permute.xlu0 %542
        %s545 = sor.u32 256, 8
        %546 = vbcast.lane.b32.xlu0 %v540, %s545
        %v547 = vpop.permute.xlu0 %546
        %s549 = sor.u32 256, 16
        %550 = vbcast.lane.b32.xlu0 %v540, %s549
        %v551 = vpop.permute.xlu0 %550
        %s553 = sor.u32 256, 24
        %554 = vbcast.lane.b32.xlu0 %v540, %s553
        %v555 = vpop.permute.xlu0 %554
        %v556 = vmul.f32 %v311, %v543
        %v557 = vmul.f32 %v312, %v543
        %v558 = vmul.f32 %v313, %v547
        %v559 = vmul.f32 %v314, %v547
        %v560 = vmul.f32 %v315, %v551
        %v561 = vmul.f32 %v316, %v551
        %v562 = vmul.f32 %v317, %v555
        %v563 = vmul.f32 %v318, %v555
        %564 = vst [vmem:[%s310] sm:$0xff] %v556
        %565 = vst [vmem:[%s310 + $0x8] sm:$0xff] %v557
        %566 = vst [vmem:[%s310 + $0x10] sm:$0xff] %v558
        %567 = vst [vmem:[%s310 + $0x18] sm:$0xff] %v559
        %568 = vst [vmem:[%s310 + $0x20] sm:$0xff] %v560
        %569 = vst [vmem:[%s310 + $0x28] sm:$0xff] %v561
        %570 = vst [vmem:[%s310 + $0x30] sm:$0xff] %v562
        %571 = vst [vmem:[%s310 + $0x38] sm:$0xff] %v563
        %s572 = sand.u32 %s185, 1
        %s573 = scalar_lea.sflag [#allocation4], %s572
        %s574 = sand.u32 %s185, 1
        %s575 = smul.addr %s574, 64
        %s576 = scalar_lea.vmem [#allocation7], %s575
        // Predicated region
        $region57: #{tpu_custom_call.1} parent=47 // pred_check
          %p577 = pneg %p195
        $region58: #{tpu_custom_call.1} parent=47 // pred_check_branch
          %579 = sbr.rel (%p577) target = $region60
        $region59: #{tpu_custom_call.1} parent=47 // pred_region
          %s581 = ssub.s32 1024, 1024
          %582 = vsyncadd %s573, %s581
          %s583 = smul.addr %s25, 8
          %s584 = smul.addr %s583, 128
          %s585 = scalar_lea.hbm %s7, %s584
          %s586 = sshll.u32 %s576, 4
          %s587 = int_to_ptr.vmem [resolvable:$true] %s586
          %592 = dma.vmem_to_hbm [thread:$0]  %s587, 1024, %s585, %s573, 256, 256, 16
        $region60: #{tpu_custom_call.1} parent=47 // pred_fallthru
          _
      $region48: #{tpu_custom_call.1} parent=5 // pred_fallthru
        _
      %p593 = scmp.le.s32.totalorder 2, %s20
      // Predicated region
      $region61: #{tpu_custom_call.1} parent=5 // pred_check
        %p594 = pneg %p593
      $region62: #{tpu_custom_call.1} parent=5 // pred_check_branch
        %596 = sbr.rel (%p594) target = $region64
      $region63: #{tpu_custom_call.1} parent=5 // pred_region
        %s597 = ssub.s32 %s20, 2
        // Predicated region
        $region65: #{tpu_custom_call.1} parent=63 // pred_check
          %p598 = pneg %p201
        $region66: #{tpu_custom_call.1} parent=63 // pred_check_branch
          %600 = sbr.rel (%p598) target = $region68
        $region67: #{tpu_custom_call.1} parent=63 // pred_region
          %s601 = sand.u32 %s186, 1
          %s602 = scalar_lea.sflag [#allocation4], %s601
          %s603 = sand.u32 %s186, 1
          %s604 = smul.addr %s603, 64
          %s605 = scalar_lea.vmem [#allocation7], %s604
          %606 = dma.done %s602, 1024
        $region68: #{tpu_custom_call.1} parent=63 // pred_fallthru
          _
      $region64: #{tpu_custom_call.1} parent=5 // pred_fallthru
        _
    $region6: #{tpu_custom_call.1} parent=1 // loop_footer
      %s24 = sadd.s32 1, %s20
    $region7: #{tpu_custom_call.1} parent=1 // loop_footer_branch
      %19 = sbr.rel target = $region3
    $region8: #{tpu_custom_call.1} parent=1 // loop_exit
      _
    %607 = vsyncpa [#allocation3], 1
    %s608 = scalar_lea.sflag [#allocation3], 1
    %609 = vsyncpa %s608, 1
    %610 = vsyncpa [#allocation4], 1
    %s611 = scalar_lea.sflag [#allocation4], 1
    %612 = vsyncpa %s611, 1
    %613 = vsyncpa [#allocation5], 1
    %s614 = scalar_lea.sflag [#allocation5], 1
    %615 = vsyncpa %s614, 1

</llo_original>
